<compile_context>
chip_gen: v7x
topology: tpu7x:2x2x1
jax: 0.10.0
libtpu: 0.0.40
codegen_flags: <defaults>
</compile_context>

<pallas_src>
import jax
import jax.numpy as jnp
from jax.experimental import pallas as pl
from jax.experimental.pallas import tpu as pltpu


def _round_up(a, m):
    return (a + m - 1) // m * m


def _choose_tile(n_rows, tm_req, min_steps=2):
    """Row tile: multiple of 8, <= round_up(N, 8); if there is enough work,
    small enough that the grid has >= min_steps steps (v7x megacore)."""
    n8 = _round_up(n_rows, 8)
    tm = min(max(8, _round_up(int(tm_req), 8)), n8)
    if n8 > min_steps * 8 and pl.cdiv(n8, tm) < min_steps:
        tm = _round_up(pl.cdiv(n8, min_steps), 8)
    return tm


def mask_bern_kernel(x_ref, w1_ref, b1_ref, w2_ref, b2_ref, p_ref, xp_ref):
    x = x_ref[...]                                            # (TM, D) native dtype
    # bf16 inputs -> keep activations in bf16 (v6e/v7x bf16 EUP, half the vreg
    # pressure on the (TM, H) tile); f32 inputs -> f32 activations (exact path).
    act_dtype = x.dtype if x.dtype == jnp.bfloat16 else jnp.float32

    # linear_layer + tanh (MXU dot, f32 accumulation; tanh on the EUP)
    h = jnp.dot(x, w1_ref[...], preferred_element_type=jnp.float32)
    h = jnp.tanh((h + b1_ref[...].astype(jnp.float32)).astype(act_dtype))

    # hidden2p -> 2 logits per token (tiny MXU pass; MXU has huge slack here)
    logits = jnp.dot(h, w2_ref[...].astype(act_dtype),
                     preferred_element_type=jnp.float32)
    logits = logits + b2_ref[...].astype(jnp.float32)         # (TM, 2) f32

    # 2-class softmax: class-1 probability == sigmoid(l1 - l0)
    d = logits[:, 1:2] - logits[:, 0:1]                       # (TM, 1)
    prob1 = 1.0 / (1.0 + jnp.exp(-d))                         # (TM, 1) f32

    p_ref[...] = logits.astype(p_ref.dtype)
    # multiply on the un-upcast x tile; cast prob1 once
    xp_ref[...] = (prob1.astype(x.dtype) * x).astype(xp_ref.dtype)


def mask_bern_forward(x, w1, b1, w2, b2, *, tm=8192, io_dtype=None):
    """x: (B, T, D) embeddings. Returns (p, x_prime): (B, T, 2), (B, T, D).

    io_dtype=jnp.bfloat16 selects the halved-HBM-bytes path (x, W in bf16,
    x' out in bf16); p (logits) always stays f32.
    """
    if io_dtype is not None:
        x = x.astype(io_dtype)
    # keep the streamed operand and the MXU weights in the same dtype
    w1 = w1.astype(x.dtype)
    w2 = w2.astype(x.dtype)

    B, T, D = x.shape
    H = w1.shape[1]
    N = B * T

    tm = _choose_tile(N, tm, min_steps=2)
    grid = (pl.cdiv(N, tm),)
    n_work = grid[0] * tm          # rows actually computed (incl. discarded tail)

    xf = x.reshape(N, D)           # contiguous view, no copy
    b1r = b1.astype(jnp.float32).reshape(1, H)
    b2r = b2.astype(jnp.float32).reshape(1, 2)

    x_it = jnp.dtype(x.dtype).itemsize
    act_it = 2 if x.dtype == jnp.bfloat16 else 4
    w_bytes = (w1.size + w2.size) * x_it + (H + 2) * 4

    # Actual per-step VMEM footprint (inputs/outputs double-buffered by Pallas)
    tile_bytes = (
        2 * tm * D * x_it          # x in
        + 2 * tm * D * x_it        # x' out
        + 2 * tm * 2 * 4           # p out
        + tm * H * (4 + act_it)    # h (f32 acc) + activation copy
        + 2 * w_bytes              # resident weights/biases
    )
    vmem_limit = int(min(max(2 * tile_bytes, 8 * 1024 * 1024), 48 * 1024 * 1024))

    cost = pl.CostEstimate(
        flops=int(2 * n_work * H * (D + 2) + n_work * (D + H + 8)),
        transcendentals=int(n_work * (H + 1)),
        bytes_accessed=int(
            n_work * D * x_it              # x in
            + w_bytes
            + n_work * 2 * 4               # p out (f32)
            + n_work * D * x_it            # x' out
        ),
    )

    p, xp = pl.pallas_call(
        mask_bern_kernel,
        out_shape=(
            jax.ShapeDtypeStruct((N, 2), jnp.float32),
            jax.ShapeDtypeStruct((N, D), x.dtype),
        ),
        grid_spec=pltpu.PrefetchScalarGridSpec(
            num_scalar_prefetch=0,
            grid=grid,
            in_specs=[
                pl.BlockSpec((tm, D), lambda i: (i, 0)),   # x rows (streamed)
                pl.BlockSpec((D, H), lambda i: (0, 0)),    # W1 (resident)
                pl.BlockSpec((1, H), lambda i: (0, 0)),    # b1
                pl.BlockSpec((H, 2), lambda i: (0, 0)),    # W2 (resident)
                pl.BlockSpec((1, 2), lambda i: (0, 0)),    # b2
            ],
            out_specs=[
                pl.BlockSpec((tm, 2), lambda i: (i, 0)),   # p logits
                pl.BlockSpec((tm, D), lambda i: (i, 0)),   # x_prime
            ],
        ),
        compiler_params=pltpu.CompilerParams(
            dimension_semantics=("parallel",),
            vmem_limit_bytes=vmem_limit,
        ),
        cost_estimate=cost,
    )(xf, w1, b1r, w2, b2r)

    return p.reshape(B, T, 2), xp.reshape(B, T, D)


def reference_forward(x, w1, b1, w2, b2):
    h = jnp.tanh(x @ w1 + b1)
    p = h @ w2 + b2
    probs = jax.nn.softmax(p, axis=2)[:, :, 1:2]
    return p, probs * x


if __name__ == "__main__":
    # shapes implied by the module: batch=2, seq=8, embed_dim=32, mask_hidden_dim=64
    B, T, D, H = 2, 8, 32, 64

    key = jax.random.PRNGKey(0)
    kx, kw1, kb1, kw2, kb2 = jax.random.split(key, 5)

    x = jax.random.normal(kx, (B, T, D), dtype=jnp.float32)

    # deterministic parameter init (uniform, ~nn.Linear-style bounds)
    bound1 = 1.0 / (D ** 0.5)
    w1 = jax.random.uniform(kw1, (D, H), jnp.float32, -bound1, bound1)
    b1 = jax.random.uniform(kb1, (H,), jnp.float32, -bound1, bound1)
    bound2 = 1.0 / (H ** 0.5)
    w2 = jax.random.uniform(kw2, (H, 2), jnp.float32, -bound2, bound2)
    b2 = jax.random.uniform(kb2, (2,), jnp.float32, -bound2, bound2)

    # 1) default (large-tile) f32 path on the module's small shapes
    p, x_prime = mask_bern_forward(x, w1, b1, w2, b2)
    jax.block_until_ready((p, x_prime))
    p_ref, xp_ref = reference_forward(x, w1, b1, w2, b2)
    assert jnp.allclose(p, p_ref, atol=1e-5, rtol=1e-5)
    assert jnp.allclose(x_prime, xp_ref, atol=1e-5, rtol=1e-5)

    # 2) multi-step grid with a ragged row count (no pad / no output slice:
    #    N = 120 -> grid of 2 tiles of 64 rows, tail rows discarded on store)
    B2, T2 = 3, 40
    x2 = jax.random.normal(jax.random.PRNGKey(1), (B2, T2, D), dtype=jnp.float32)
    p2, xp2 = mask_bern_forward(x2, w1, b1, w2, b2, tm=64)
    jax.block_until_ready((p2, xp2))
    p2_ref, xp2_ref = reference_forward(x2, w1, b1, w2, b2)
    assert jnp.allclose(p2, p2_ref, atol=1e-5, rtol=1e-5)
    assert jnp.allclose(xp2, xp2_ref, atol=1e-5, rtol=1e-5)

    # 3) bf16 I/O path (halved HBM bytes; f32 accumulation kept on the dots)
    p3, xp3 = mask_bern_forward(x2, w1, b1, w2, b2, io_dtype=jnp.bfloat16)
    jax.block_until_ready((p3, xp3))
    x2_bf = x2.astype(jnp.bfloat16).astype(jnp.float32)
    w1_bf = w1.astype(jnp.bfloat16).astype(jnp.float32)
    w2_bf = w2.astype(jnp.bfloat16).astype(jnp.float32)
    p3_ref, xp3_ref = reference_forward(x2_bf, w1_bf, b1, w2_bf, b2)
    assert jnp.allclose(p3, p3_ref, atol=5e-2, rtol=5e-2)
    assert jnp.allclose(xp3.astype(jnp.float32), xp3_ref, atol=5e-2, rtol=5e-2)

    print("KERNEL_OK")
</pallas_src>

<mosaic_0001>
module attributes {stable_mosaic.version = 11 : i64} {
  func.func @mask_bern_kernel(%arg0: i32, %arg1: memref<16x32xf32, #tpu.memory_space<vmem>>, %arg2: memref<32x64xf32, #tpu.memory_space<vmem>>, %arg3: memref<1x64xf32, #tpu.memory_space<vmem>>, %arg4: memref<64x2xf32, #tpu.memory_space<vmem>>, %arg5: memref<1x2xf32, #tpu.memory_space<vmem>>, %arg6: memref<16x2xf32, #tpu.memory_space<vmem>>, %arg7: memref<16x32xf32, #tpu.memory_space<vmem>>) attributes {dimension_semantics = [#tpu.dimension_semantics<parallel>], iteration_bounds = array<i64: 1>, scalar_prefetch = 0 : i64, scratch_operands = 0 : i64, tpu.core_type = #tpu.core_type<tc>, window_params = [{transform_indices = @transform_0, window_bounds = array<i64: 16, 32>}, {pipeline_mode = #tpu.pipeline_mode<synchronous>, transform_indices = @transform_1, window_bounds = array<i64: 32, 64>}, {pipeline_mode = #tpu.pipeline_mode<synchronous>, transform_indices = @transform_2, window_bounds = array<i64: 1, 64>}, {pipeline_mode = #tpu.pipeline_mode<synchronous>, transform_indices = @transform_3, window_bounds = array<i64: 64, 2>}, {pipeline_mode = #tpu.pipeline_mode<synchronous>, transform_indices = @transform_4, window_bounds = array<i64: 1, 2>}, {transform_indices = @transform_5, window_bounds = array<i64: 16, 2>}, {transform_indices = @transform_6, window_bounds = array<i64: 16, 32>}]} {
    %c0 = arith.constant 0 : index
    %c0_0 = arith.constant 0 : index
    %0 = vector.load %arg1[%c0, %c0_0] : memref<16x32xf32, #tpu.memory_space<vmem>>, vector<16x32xf32>
    %c0_1 = arith.constant 0 : index
    %c0_2 = arith.constant 0 : index
    %1 = vector.load %arg2[%c0_1, %c0_2] : memref<32x64xf32, #tpu.memory_space<vmem>>, vector<32x64xf32>
    %cst = arith.constant dense<0.000000e+00> : vector<16x64xf32>
    %2 = tpu.matmul %0, %1, %cst {dimension_numbers = #tpu.dot_dimension_numbers<[1], [0], [0], [1], [0, 0, 1, 1], [], []>} : vector<16x32xf32>, vector<32x64xf32>, vector<16x64xf32> -> vector<16x64xf32>
    %c0_3 = arith.constant 0 : index
    %c0_4 = arith.constant 0 : index
    %3 = vector.load %arg3[%c0_3, %c0_4] : memref<1x64xf32, #tpu.memory_space<vmem>>, vector<1x64xf32>
    %4 = vector.broadcast %3 : vector<1x64xf32> to vector<16x64xf32>
    %5 = arith.addf %2, %4 : vector<16x64xf32>
    %6 = math.tanh %5 : vector<16x64xf32>
    %c0_5 = arith.constant 0 : index
    %c0_6 = arith.constant 0 : index
    %7 = vector.load %arg4[%c0_5, %c0_6] : memref<64x2xf32, #tpu.memory_space<vmem>>, vector<64x2xf32>
    %cst_7 = arith.constant dense<0.000000e+00> : vector<16x2xf32>
    %8 = tpu.matmul %6, %7, %cst_7 {dimension_numbers = #tpu.dot_dimension_numbers<[1], [0], [0], [1], [0, 0, 1, 1], [], []>} : vector<16x64xf32>, vector<64x2xf32>, vector<16x2xf32> -> vector<16x2xf32>
    %c0_8 = arith.constant 0 : index
    %c0_9 = arith.constant 0 : index
    %9 = vector.load %arg5[%c0_8, %c0_9] : memref<1x2xf32, #tpu.memory_space<vmem>>, vector<1x2xf32>
    %10 = vector.broadcast %9 : vector<1x2xf32> to vector<16x2xf32>
    %11 = arith.addf %8, %10 : vector<16x2xf32>
    %12 = vector.extract_strided_slice %11 {offsets = [0, 1], sizes = [16, 1], strides = [1, 1]} : vector<16x2xf32> to vector<16x1xf32>
    %13 = vector.extract_strided_slice %11 {offsets = [0, 0], sizes = [16, 1], strides = [1, 1]} : vector<16x2xf32> to vector<16x1xf32>
    %14 = arith.subf %12, %13 : vector<16x1xf32>
    %cst_10 = arith.constant 0.000000e+00 : f32
    %15 = vector.broadcast %cst_10 : f32 to vector<16x1xf32>
    %16 = arith.subf %15, %14 : vector<16x1xf32>
    %17 = math.exp %16 : vector<16x1xf32>
    %cst_11 = arith.constant 1.000000e+00 : f32
    %18 = vector.broadcast %cst_11 : f32 to vector<16x1xf32>
    %19 = arith.addf %18, %17 : vector<16x1xf32>
    %cst_12 = arith.constant 1.000000e+00 : f32
    %20 = vector.broadcast %cst_12 : f32 to vector<16x1xf32>
    %21 = arith.divf %20, %19 : vector<16x1xf32>
    %c0_13 = arith.constant 0 : index
    %c0_14 = arith.constant 0 : index
    %22 = vector.load %arg6[%c0_13, %c0_14] : memref<16x2xf32, #tpu.memory_space<vmem>>, vector<16x2xf32>
    tpu.vector_store %arg6[%c0_13, %c0_14], %11 {strides = array<i32>} : memref<16x2xf32, #tpu.memory_space<vmem>>, vector<16x2xf32>,
    %23 = vector.broadcast %21 : vector<16x1xf32> to vector<16x32xf32>
    %24 = arith.mulf %23, %0 : vector<16x32xf32>
    %c0_15 = arith.constant 0 : index
    %c0_16 = arith.constant 0 : index
    %25 = vector.load %arg7[%c0_15, %c0_16] : memref<16x32xf32, #tpu.memory_space<vmem>>, vector<16x32xf32>
    tpu.vector_store %arg7[%c0_15, %c0_16], %24 {strides = array<i32>} : memref<16x32xf32, #tpu.memory_space<vmem>>, vector<16x32xf32>,
    return
  }
  func.func @transform_0(%arg0: i32) -> (i32, i32) {
    %c0_i32 = arith.constant 0 : i32
    %c0_i32_0 = arith.constant 0 : i32
    return %arg0, %c0_i32 : i32, i32
  }
  func.func @transform_1(%arg0: i32) -> (i32, i32) {
    %c0_i32 = arith.constant 0 : i32
    %c0_i32_0 = arith.constant 0 : i32
    %c0_i32_1 = arith.constant 0 : i32
    return %c0_i32, %c0_i32_0 : i32, i32
  }
  func.func @transform_2(%arg0: i32) -> (i32, i32) {
    %c0_i32 = arith.constant 0 : i32
    %c0_i32_0 = arith.constant 0 : i32
    %c0_i32_1 = arith.constant 0 : i32
    return %c0_i32, %c0_i32_0 : i32, i32
  }
  func.func @transform_3(%arg0: i32) -> (i32, i32) {
    %c0_i32 = arith.constant 0 : i32
    %c0_i32_0 = arith.constant 0 : i32
    %c0_i32_1 = arith.constant 0 : i32
    return %c0_i32, %c0_i32_0 : i32, i32
  }
  func.func @transform_4(%arg0: i32) -> (i32, i32) {
    %c0_i32 = arith.constant 0 : i32
    %c0_i32_0 = arith.constant 0 : i32
    %c0_i32_1 = arith.constant 0 : i32
    return %c0_i32, %c0_i32_0 : i32, i32
  }
  func.func @transform_5(%arg0: i32) -> (i32, i32) {
    %c0_i32 = arith.constant 0 : i32
    %c0_i32_0 = arith.constant 0 : i32
    return %arg0, %c0_i32 : i32, i32
  }
  func.func @transform_6(%arg0: i32) -> (i32, i32) {
    %c0_i32 = arith.constant 0 : i32
    %c0_i32_0 = arith.constant 0 : i32
    return %arg0, %c0_i32 : i32, i32
  }
}

</mosaic_0001>

<llo_original>
// kernel: tpu_custom_call.1
$region0: #{tpu_custom_call.1}
  #allocation0 [shape = 'u32[]', space=smem, size = 0x4, offset = 0x4, fixed_abs, tag = 'smem constant byte address 0x4 - core index']
  #allocation1 [shape = 'u32[144,128]{1,0:T(1,128)}', space=vmem, size = 0x12000, scoped, tag = 'internal scratch']
  %s0 = inlined_call_operand.vmem [shape: f32[16,32], index: 0, kind: input, shape index: {}]
  %s1 = inlined_call_operand.vmem [shape: f32[32,64], index: 1, kind: input, shape index: {}]
  %s2 = inlined_call_operand.vmem [shape: f32[1,64], index: 2, kind: input, shape index: {}]
  %s3 = inlined_call_operand.vmem [shape: f32[64,2], index: 3, kind: input, shape index: {}]
  %s4 = inlined_call_operand.vmem [shape: f32[1,2], index: 4, kind: input, shape index: {}]
  %s5 = inlined_call_operand.vmem [shape: f32[16,2], index: 5, kind: output, shape index: {0}]
  %s6 = inlined_call_operand.hbm [shape: f32[16,32], index: 6, kind: output, shape index: {1}]
  %7 = xla_tuple %s5, %s6
  %s8 = sld [smem:[#allocation0]]
  $region38: #{tpu_custom_call.1} parent=0
    _
  %s10 = ssub.s32 1, %s8
  %s11 = scalar_select 0, %s10, %s8
  $region1: #{tpu_custom_call.1} parent=0
    #allocation2 [shape = 'u8[8192]{0}', space=vmem, size = 0x2000, scoped, tag = 'output window, operand 1, single buffered']
    #allocation3 [shape = 's32[1]{0}', space=sflag, size = 0x4, scoped, tag = 'scoped memory for tpu_custom_call.1']
    %12 = vsyncpa [#allocation3], 0
    // Predicated region
    $region2: #{tpu_custom_call.1} parent=1 // pred_check
      _
    $region3: #{tpu_custom_call.1} parent=1 // pred_check_branch
      %14 = sbr.rel (0) target = $region5
    $region4: #{tpu_custom_call.1} parent=1 // pred_region
      _
    $region5: #{tpu_custom_call.1} parent=1 // pred_fallthru
      _
    // Predicated region
    $region6: #{tpu_custom_call.1} parent=1 // pred_check
      _
    $region7: #{tpu_custom_call.1} parent=1 // pred_check_branch
      %16 = sbr.rel (0) target = $region9
    $region8: #{tpu_custom_call.1} parent=1 // pred_region
      _
    $region9: #{tpu_custom_call.1} parent=1 // pred_fallthru
      _
    // Predicated region
    $region10: #{tpu_custom_call.1} parent=1 // pred_check
      _
    $region11: #{tpu_custom_call.1} parent=1 // pred_check_branch
      %18 = sbr.rel (0) target = $region13
    $region12: #{tpu_custom_call.1} parent=1 // pred_region
      _
    $region13: #{tpu_custom_call.1} parent=1 // pred_fallthru
      _
    // Predicated region
    $region14: #{tpu_custom_call.1} parent=1 // pred_check
      _
    $region15: #{tpu_custom_call.1} parent=1 // pred_check_branch
      %20 = sbr.rel (0) target = $region17
    $region16: #{tpu_custom_call.1} parent=1 // pred_region
      _
    $region17: #{tpu_custom_call.1} parent=1 // pred_fallthru
      _
    // Predicated region
    $region18: #{tpu_custom_call.1} parent=1 // pred_check
      _
    $region19: #{tpu_custom_call.1} parent=1 // pred_check_branch
      %22 = sbr.rel (0) target = $region21
    $region20: #{tpu_custom_call.1} parent=1 // pred_region
      _
    $region21: #{tpu_custom_call.1} parent=1 // pred_fallthru
      _
    %v23 = vld [vmem:[%s0] sm:$0xff]
    %v24 = vld [vmem:[%s0 + $0x8] sm:$0xff]
    %v25 = vld [vmem:[%s1] sm:$0xff]
    %v26 = vld [vmem:[%s1 + $0x8] sm:$0xff]
    %v27 = vld [vmem:[%s1 + $0x10] sm:$0xff]
    %v28 = vld [vmem:[%s1 + $0x18] sm:$0xff]
    %v29 = vld [vmem:[%s2] sm:$0x1]
    %v31 = vlaneseq
    %v32 = vshrl.u32 %v31, 7
    %v33 = vsub.s32 0, %v32
    %v34 = vrot.slane %v29, %v33
    %vm36 = vcmask 261120
    %v38 = vsel %vm36, %v23, 0
    %v41 = vsel %vm36, %v24, 0
    %43 = vmatprep.subr.mxu0 0.0
    %44 = vmatpush1.msra.mxu0 %v25
    %45 = vmatprep.subr.mxu0 0.0
    %46 = vmatpush1.msra.mxu0 %v26
    %47 = vmatprep.subr.mxu0 0.0
    %48 = vmatpush1.msra.mxu0 %v27
    %49 = vmatprep.subr.mxu0 0.0
    %50 = vmatpush1.msra.mxu0 %v28
    %51 = vmatprep.subr.mxu0 0.0
    %52 = vmatpush1.msra.mxu0 0.0
    %53 = vmatprep.subr.mxu0 0.0
    %54 = vmatpush1.msra.mxu0 0.0
    %55 = vmatprep.subr.mxu0 0.0
    %56 = vmatpush1.msra.mxu0 0.0
    %57 = vmatprep.subr.mxu0 0.0
    %58 = vmatpush1.msra.mxu0 0.0
    %59 = vmatprep.subr.mxu0 0.0
    %60 = vmatpush1.msra.mxu0 0.0
    %61 = vmatprep.subr.mxu0 0.0
    %62 = vmatpush1.msra.mxu0 0.0
    %63 = vmatprep.subr.mxu0 0.0
    %64 = vmatpush1.msra.mxu0 0.0
    %65 = vmatprep.subr.mxu0 0.0
    %66 = vmatpush1.msra.mxu0 0.0
    %67 = vmatprep.subr.mxu0 0.0
    %68 = vmatpush1.msra.mxu0 0.0
    %69 = vmatprep.subr.mxu0 0.0
    %70 = vmatpush1.msra.mxu0 0.0
    %71 = vmatprep.subr.mxu0 0.0
    %72 = vmatpush1.msra.mxu0 0.0
    %73 = vmatprep.subr.mxu0 0.0
    %74 = vmatpush1.msra.mxu0 0.0
    %75 = vmatprep.subr.mxu0 0.0
    %76 = vmatpush1.msra.mxu0 0.0
    %77 = vmatprep.subr.mxu0 0.0
    %78 = vmatpush1.msra.mxu0 0.0
    %79 = vmatprep.subr.mxu0 0.0
    %80 = vmatpush1.msra.mxu0 0.0
    %81 = vmatprep.subr.mxu0 0.0
    %82 = vmatpush1.msra.mxu0 0.0
    %83 = vmatprep.subr.mxu0 0.0
    %84 = vmatpush1.msra.mxu0 0.0
    %85 = vmatprep.subr.mxu0 0.0
    %86 = vmatpush1.msra.mxu0 0.0
    %87 = vmatprep.subr.mxu0 0.0
    %88 = vmatpush1.msra.mxu0 0.0
    %89 = vmatprep.subr.mxu0 0.0
    %90 = vmatpush1.msra.mxu0 0.0
    %91 = vmatprep.subr.mxu0 0.0
    %92 = vmatpush1.msra.mxu0 0.0
    %93 = vmatprep.subr.mxu0 0.0
    %94 = vmatpush1.msra.mxu0 0.0
    %95 = vmatprep.subr.mxu0 0.0
    %96 = vmatpush1.msra.mxu0 0.0
    %97 = vmatprep.subr.mxu0 0.0
    %98 = vmatpush1.msra.mxu0 0.0
    %99 = vmatprep.subr.mxu0 0.0
    %100 = vmatpush1.msra.mxu0 0.0
    %101 = vmatprep.subr.mxu0 0.0
    %102 = vmatpush1.msra.mxu0 0.0
    %103 = vmatprep.subr.mxu0 0.0
    %104 = vmatpush1.msra.mxu0 0.0
    %105 = vmatprep.subr.mxu0 0.0
    %106 = vmatpush1.msra.mxu0 0.0
    %107 = vmatprep.mubr.f32.mxu0 0.0
    %108 = vmatmul.mubr.f32.gmra.mrb[0].mxu0 %v38
    %v109 = vpop.f32.mrb[0].mxu0
    %v110 = vadd.f32 %v34, %v109
    %v111 = vpop.f32.mrb[0].mxu0
    %112 = vmatprep.mubr.f32.mxu0 0.0
    %113 = vmatmul.mubr.f32.gmra.mrb[0].mxu0 %v41
    %v114 = vpop.f32.mrb[0].mxu0
    %v115 = vadd.f32 %v34, %v114
    %v116 = vpop.f32.mrb[0].mxu0
    %117 = vdwg.mxu0
    %v118 = vtanh.pop %v110
    %v119 = vtanh.pop %v115
    %v120 = vld [vmem:[%s3] sm:$0xff]
    %v121 = vld [vmem:[%s3 + $0x8] sm:$0xff]
    %v122 = vld [vmem:[%s3 + $0x10] sm:$0xff]
    %v123 = vld [vmem:[%s3 + $0x18] sm:$0xff]
    %v124 = vld [vmem:[%s3 + $0x20] sm:$0xff]
    %v125 = vld [vmem:[%s3 + $0x28] sm:$0xff]
    %v126 = vld [vmem:[%s3 + $0x30] sm:$0xff]
    %v127 = vld [vmem:[%s3 + $0x38] sm:$0xff]
    %v128 = vld [vmem:[%s4] sm:$0x1]
    %v130 = vlaneseq
    %v131 = vshrl.u32 %v130, 7
    %v132 = vsub.s32 0, %v131
    %v133 = vrot.slane %v128, %v132
    %vm135 = vcmask 523264
    %v137 = vsel %vm135, %v118, 0
    %v140 = vsel %vm135, %v119, 0
    %142 = vmatprep.subr.mxu0 0.0
    %143 = vmatpush1.msra.mxu0 %v120
    %144 = vmatprep.subr.mxu0 0.0
    %145 = vmatpush1.msra.mxu0 %v121
    %146 = vmatprep.subr.mxu0 0.0
    %147 = vmatpush1.msra.mxu0 %v122
    %148 = vmatprep.subr.mxu0 0.0
    %149 = vmatpush1.msra.mxu0 %v123
    %150 = vmatprep.subr.mxu0 0.0
    %151 = vmatpush1.msra.mxu0 %v124
    %152 = vmatprep.subr.mxu0 0.0
    %153 = vmatpush1.msra.mxu0 %v125
    %154 = vmatprep.subr.mxu0 0.0
    %155 = vmatpush1.msra.mxu0 %v126
    %156 = vmatprep.subr.mxu0 0.0
    %157 = vmatpush1.msra.mxu0 %v127
    %158 = vmatprep.subr.mxu0 0.0
    %159 = vmatpush1.msra.mxu0 0.0
    %160 = vmatprep.subr.mxu0 0.0
    %161 = vmatpush1.msra.mxu0 0.0
    %162 = vmatprep.subr.mxu0 0.0
    %163 = vmatpush1.msra.mxu0 0.0
    %164 = vmatprep.subr.mxu0 0.0
    %165 = vmatpush1.msra.mxu0 0.0
    %166 = vmatprep.subr.mxu0 0.0
    %167 = vmatpush1.msra.mxu0 0.0
    %168 = vmatprep.subr.mxu0 0.0
    %169 = vmatpush1.msra.mxu0 0.0
    %170 = vmatprep.subr.mxu0 0.0
    %171 = vmatpush1.msra.mxu0 0.0
    %172 = vmatprep.subr.mxu0 0.0
    %173 = vmatpush1.msra.mxu0 0.0
    %174 = vmatprep.subr.mxu0 0.0
    %175 = vmatpush1.msra.mxu0 0.0
    %176 = vmatprep.subr.mxu0 0.0
    %177 = vmatpush1.msra.mxu0 0.0
    %178 = vmatprep.subr.mxu0 0.0
    %179 = vmatpush1.msra.mxu0 0.0
    %180 = vmatprep.subr.mxu0 0.0
    %181 = vmatpush1.msra.mxu0 0.0
    %182 = vmatprep.subr.mxu0 0.0
    %183 = vmatpush1.msra.mxu0 0.0
    %184 = vmatprep.subr.mxu0 0.0
    %185 = vmatpush1.msra.mxu0 0.0
    %186 = vmatprep.subr.mxu0 0.0
    %187 = vmatpush1.msra.mxu0 0.0
    %188 = vmatprep.subr.mxu0 0.0
    %189 = vmatpush1.msra.mxu0 0.0
    %190 = vmatprep.subr.mxu0 0.0
    %191 = vmatpush1.msra.mxu0 0.0
    %192 = vmatprep.subr.mxu0 0.0
    %193 = vmatpush1.msra.mxu0 0.0
    %194 = vmatprep.subr.mxu0 0.0
    %195 = vmatpush1.msra.mxu0 0.0
    %196 = vmatprep.subr.mxu0 0.0
    %197 = vmatpush1.msra.mxu0 0.0
    %198 = vmatprep.subr.mxu0 0.0
    %199 = vmatpush1.msra.mxu0 0.0
    %200 = vmatprep.subr.mxu0 0.0
    %201 = vmatpush1.msra.mxu0 0.0
    %202 = vmatprep.subr.mxu0 0.0
    %203 = vmatpush1.msra.mxu0 0.0
    %204 = vmatprep.subr.mxu0 0.0
    %205 = vmatpush1.msra.mxu0 0.0
    %206 = vmatprep.mubr.f32.mxu0 0.0
    %207 = vmatmul.mubr.f32.gmra.mrb[0].mxu0 %v137
    %v208 = vpop.f32.mrb[0].mxu0
    %v209 = vadd.f32 %v133, %v208
    %v210 = vpop.f32.mrb[0].mxu0
    %211 = vmatprep.mubr.f32.mxu0 0.0
    %212 = vmatmul.mubr.f32.gmra.mrb[0].mxu0 %v140
    %v213 = vpop.f32.mrb[0].mxu0
    %v214 = vadd.f32 %v133, %v213
    %v215 = vpop.f32.mrb[0].mxu0
    %216 = vdwg.mxu0
    %219 = vrot.lane.b32.xlu0 %v209, 1
    %v220 = vpop.permute.xlu0 %219
    %221 = vrot.lane.b32.xlu0 %v214, 1
    %v222 = vpop.permute.xlu0 %221
    %v225 = vsub.f32 %v209, %v220
    %v226 = vsub.f32 %v214, %v222
    %v227 = vsub.f32 0.0, %v225
    %v228 = vsub.f32 0.0, %v226
    %v229 = vmul.f32 %v227, 1.442695
    %v230 = vpow.pop %v229
    %v231 = vmul.f32 %v228, 1.442695
    %v232 = vpow.pop %v231
    %v233 = vadd.f32 %v230, 1.0
    %v234 = vadd.f32 %v232, 1.0
    %v235 = vrcp.pop %v233
    %v236 = vmul.f32 1.0, %v235
    %v237 = vrcp.pop %v234
    %v238 = vmul.f32 1.0, %v237
    %vm239 = vcmask 15360
    %240 = vst.msk [vmem:[%s5] sm:$0xff] %vm239, %v209
    %241 = vst.msk [vmem:[%s5 + $0x8] sm:$0xff] %vm239, %v214
    %243 = vset.pattern.permute.xlu0 1
    %244 = vperm.xlu0 %243, %v236
    %v245 = vpop.permute.xlu0 %244
    %248 = vset.pattern.permute.xlu0 1
    %249 = vperm.xlu0 %248, %v238
    %v250 = vpop.permute.xlu0 %249
    %v252 = vmul.f32 %v245, %v23
    %v253 = vmul.f32 %v250, %v24
    %254 = vst.msk [vmem:[#allocation2] sm:$0xff] %vm36, %v252
    %255 = vst.msk [vmem:[#allocation2 + $0x8] sm:$0xff] %vm36, %v253
    // Predicated region
    $region22: #{tpu_custom_call.1} parent=1 // pred_check
      _
    $region23: #{tpu_custom_call.1} parent=1 // pred_check_branch
      %257 = sbr.rel (0) target = $region25
    $region24: #{tpu_custom_call.1} parent=1 // pred_region
      _
    $region25: #{tpu_custom_call.1} parent=1 // pred_fallthru
      _
    // Predicated region
    $region26: #{tpu_custom_call.1} parent=1 // pred_check
      _
    $region27: #{tpu_custom_call.1} parent=1 // pred_check_branch
      %259 = sbr.rel (0) target = $region29
    $region28: #{tpu_custom_call.1} parent=1 // pred_region
      %s261 = ssub.s32 256, 256
      %262 = vsyncadd [#allocation3], %s261
      %s263 = sshll.u32 [#allocation2], 4
      %s264 = int_to_ptr.vmem [resolvable:$true] %s263
      %269 = dma.vmem_to_hbm [thread:$0]  %s264, 256, %s6, [#allocation3], 128, 128, 8
    $region29: #{tpu_custom_call.1} parent=1 // pred_fallthru
      _
    // Predicated region
    $region30: #{tpu_custom_call.1} parent=1 // pred_check
      _
    $region31: #{tpu_custom_call.1} parent=1 // pred_check_branch
      %271 = sbr.rel (0) target = $region33
    $region32: #{tpu_custom_call.1} parent=1 // pred_region
      _
    $region33: #{tpu_custom_call.1} parent=1 // pred_fallthru
      _
    // Predicated region
    $region34: #{tpu_custom_call.1} parent=1 // pred_check
      _
    $region35: #{tpu_custom_call.1} parent=1 // pred_check_branch
      %273 = sbr.rel (0) target = $region37
    $region36: #{tpu_custom_call.1} parent=1 // pred_region
      %274 = dma.done [#allocation3], 256
    $region37: #{tpu_custom_call.1} parent=1 // pred_fallthru
      _
    %275 = vsyncpa [#allocation3], 1

</llo_original>
